<compile_context>
chip_gen: v7x
topology: tpu7x:2x2x1
jax: 0.10.0
libtpu: 0.0.40
codegen_flags: <defaults>
</compile_context>

<pallas_src>
import functools

import jax
import jax.numpy as jnp
from jax.experimental import pallas as pl
from jax.experimental.pallas import tpu as pltpu


def _round_up(n, m):
    return ((n + m - 1) // m) * m


def _pick_tile_b(B):
    """Batch tile: small for latency, 2 grid steps for v7x dual-TC, big for
    throughput on single-TC v5e/v6e (per-step overhead ~0.35us)."""
    if B <= 8:
        return 8                                   # single-sample latency path
    if B <= 1024:
        return _round_up(pl.cdiv(B, 2), 8)         # 2 parallel grid steps
    return 512                                     # amortize step/MXU overhead


def _mlp_kernel(n_hidden, compute_dtype, *refs):
    """refs = (x_ref,
               W0, b0, ..., W_{n_hidden-1}, b_{n_hidden-1},   # hidden layers
               w_out_row, b_out,                              # final (hl -> 1)
               out_ref)."""
    x_ref = refs[0]
    out_ref = refs[-1]
    params = refs[1:-1]

    h = x_ref[...]                                  # (tile_b, in_sub), compute_dtype
    for i in range(n_hidden):
        w = params[2 * i][...]                      # (d_in, hl_pad), compute_dtype
        b = params[2 * i + 1][...]                  # (1, hl_pad), f32
        acc = jnp.dot(h.astype(compute_dtype), w,
                      preferred_element_type=jnp.float32)   # MXU, f32 accumulate
        h = jnp.maximum(acc + b, 0.0)               # bias + ReLU in f32 (VPU)

    # Final Linear(hl_width, 1) as a VPU multiply + lane reduction
    # (avoids a wasteful N=1 MXU pass).  h is f32 here.
    w_out = params[2 * n_hidden][...]               # (1, hl_pad), f32
    b_out = params[2 * n_hidden + 1][...]           # (1, 1), f32
    y = jnp.sum(h * w_out, axis=-1, keepdims=True) + b_out   # (tile_b, 1), f32
    out_ref[...] = y.astype(out_ref.dtype)          # packed (tile_b, 1) store


def prepare_params(weights, biases, compute_dtype=jnp.bfloat16):
    """Pad + cast parameters ONCE (outside the hot path).

    weights[i]: (in_i, out_i) f32, biases[i]: (1, out_i) f32; last layer out=1.
    Hidden weights are padded to (8-multiple, 128-multiple) and cast to
    compute_dtype; biases stay f32; the final (hl,1) weight becomes a padded
    (1, hl_pad) f32 row. Zero padding is exact for Linear+ReLU.
    """
    n_hidden = len(weights) - 1
    in_w = weights[0].shape[0]
    hl = weights[0].shape[1]
    in_sub = _round_up(in_w, 8)
    hl_pad = _round_up(hl, 128)

    hidden_w, hidden_b = [], []
    for li in range(n_hidden):
        w = jnp.asarray(weights[li], jnp.float32)
        b = jnp.asarray(biases[li], jnp.float32).reshape(1, -1)
        d_in = in_sub if li == 0 else hl_pad
        w_p = jnp.zeros((d_in, hl_pad), jnp.float32).at[:w.shape[0], :w.shape[1]].set(w)
        b_p = jnp.zeros((1, hl_pad), jnp.float32).at[:, :b.shape[1]].set(b)
        hidden_w.append(w_p.astype(compute_dtype))
        hidden_b.append(b_p)

    w_last = jnp.asarray(weights[-1], jnp.float32).reshape(-1)          # (hl,)
    w_out = jnp.zeros((1, hl_pad), jnp.float32).at[0, :w_last.shape[0]].set(w_last)
    b_out = jnp.asarray(biases[-1], jnp.float32).reshape(1, 1)

    return {"hidden_w": tuple(hidden_w), "hidden_b": tuple(hidden_b),
            "w_out": w_out, "b_out": b_out}


@functools.partial(jax.jit, static_argnames=("tile_b",))
def _forward_impl(x, params, tile_b):
    hidden_w = params["hidden_w"]
    hidden_b = params["hidden_b"]
    w_out = params["w_out"]
    b_out = params["b_out"]

    n_hidden = len(hidden_w)
    compute_dtype = hidden_w[0].dtype
    in_sub = hidden_w[0].shape[0]
    hl_pad = hidden_w[0].shape[1]

    B, in_w = x.shape
    b_pad = _round_up(max(B, 1), tile_b)

    # Only batch-pad + cast x (narrow, compute-dtype DMA; fuses under jit).
    x_p = jnp.zeros((b_pad, in_sub), compute_dtype).at[:B, :in_w].set(
        x.astype(compute_dtype))

    args = [x_p]
    in_specs = [pl.BlockSpec((tile_b, in_sub), lambda i: (i, 0))]
    for li in range(n_hidden):
        args += [hidden_w[li], hidden_b[li]]
        # Constant index_maps -> parameters stay VMEM-resident across steps.
        in_specs += [pl.BlockSpec(hidden_w[li].shape, lambda i: (0, 0)),
                     pl.BlockSpec(hidden_b[li].shape, lambda i: (0, 0))]
    args += [w_out, b_out]
    in_specs += [pl.BlockSpec(w_out.shape, lambda i: (0, 0)),
                 pl.BlockSpec(b_out.shape, lambda i: (0, 0))]

    flops = 2 * b_pad * (in_sub * hl_pad
                         + max(n_hidden - 1, 0) * hl_pad * hl_pad
                         + hl_pad)
    bytes_accessed = (x_p.size * x_p.dtype.itemsize
                      + sum(a.size * a.dtype.itemsize for a in args[1:])
                      + b_pad * 4)

    kernel = functools.partial(_mlp_kernel, n_hidden, compute_dtype)

    out = pl.pallas_call(
        kernel,
        grid=(b_pad // tile_b,),
        in_specs=in_specs,
        out_specs=pl.BlockSpec((tile_b, 1), lambda i: (i, 0)),
        out_shape=jax.ShapeDtypeStruct((b_pad, 1), jnp.float32),
        compiler_params=pltpu.CompilerParams(
            dimension_semantics=("parallel",)),
        cost_estimate=pl.CostEstimate(flops=flops, transcendentals=0,
                                      bytes_accessed=bytes_accessed),
    )(*args)

    return out[:B]


def mlp_forward(x, params, *, tile_b=None):
    """x: (B, input_width) f32. params: output of prepare_params().
    Returns (B, 1) float32 (caller does .squeeze()/.item() like the module)."""
    if tile_b is None:
        tile_b = _pick_tile_b(x.shape[0])
    return _forward_impl(x, params, tile_b)


def build_params(key, input_width, hl_width, depth):
    """Shapes mirror modelNN; weights use kaiming_uniform (a=0) like
    init_weights_he -> bound = sqrt(6/fan_in); biases keep torch.nn.Linear's
    default uniform(-1/sqrt(fan_in), 1/sqrt(fan_in)).  Weights are (in, out)."""
    dims = [(input_width, hl_width)]
    for _ in range(1, depth):
        dims.append((hl_width, hl_width))
    dims.append((hl_width, 1))

    weights, biases = [], []
    for (fan_in, fan_out) in dims:
        key, kw, kb = jax.random.split(key, 3)
        bound = jnp.sqrt(6.0 / fan_in)
        w = jax.random.uniform(kw, (fan_in, fan_out), jnp.float32, -bound, bound)
        b_bound = 1.0 / jnp.sqrt(fan_in)
        b = jax.random.uniform(kb, (1, fan_out), jnp.float32, -b_bound, b_bound)
        weights.append(w)
        biases.append(b)
    return weights, biases


def reference_forward(x, weights, biases, compute_dtype=jnp.float32):
    """Pure-JAX reference. compute_dtype=bf16 mirrors the fast kernel path;
    compute_dtype=f32 is the exact PyTorch-f32 semantics."""
    h = x.astype(jnp.float32)
    n_hidden = len(weights) - 1
    for i in range(n_hidden):
        acc = jnp.dot(h.astype(compute_dtype),
                      weights[i].astype(compute_dtype),
                      preferred_element_type=jnp.float32,
                      precision=jax.lax.Precision.HIGHEST)
        h = jnp.maximum(acc + biases[i].reshape(1, -1), 0.0)
    return (jnp.dot(h, weights[-1], precision=jax.lax.Precision.HIGHEST)
            + biases[-1].reshape(1, 1))


if __name__ == "__main__":
    # Small shapes consistent with the module: input_width=32, hl_width=32,
    # depth=3 (3 ReLU'd linears + a 1-wide output linear).  batch=256 exercises
    # a 2-step parallel batch grid.
    input_width, hl_width, depth = 32, 32, 3
    batch = 256

    key = jax.random.PRNGKey(0)
    key, kx = jax.random.split(key)
    x = jax.random.normal(kx, (batch, input_width), jnp.float32)
    weights, biases = build_params(key, input_width, hl_width, depth)

    # Fast bf16 path (f32 MXU accumulation) vs a precision-matched reference.
    params_bf16 = prepare_params(weights, biases, compute_dtype=jnp.bfloat16)
    out_bf16 = jax.block_until_ready(mlp_forward(x, params_bf16))       # (B, 1)
    ref_bf16 = jax.block_until_ready(
        reference_forward(x, weights, biases, jnp.bfloat16))
    assert out_bf16.shape == (batch, 1)
    err_bf16 = float(jnp.max(jnp.abs(out_bf16 - ref_bf16)))
    assert jnp.allclose(out_bf16, ref_bf16, rtol=1e-3, atol=1e-4), err_bf16

    # Exact f32 path: parity with the original f32 PyTorch model's math.
    params_f32 = prepare_params(weights, biases, compute_dtype=jnp.float32)
    out_f32 = jax.block_until_ready(mlp_forward(x, params_f32))
    ref_f32 = jax.block_until_ready(
        reference_forward(x, weights, biases, jnp.float32))
    err_f32 = float(jnp.max(jnp.abs(out_f32 - ref_f32)))
    assert jnp.allclose(out_f32, ref_f32, rtol=1e-3, atol=1e-3), err_f32

    # Module-faithful single-sample usage: forward(x).squeeze().item() -> scalar
    # (uses the small tile_b=8 latency path).
    single = jax.block_until_ready(mlp_forward(x[:1], params_f32))
    scalar = float(single.squeeze())
    assert jnp.allclose(jnp.float32(scalar), ref_f32[0, 0], rtol=1e-3, atol=1e-3)

    print("KERNEL_OK")
</pallas_src>

<mosaic_0001>
module attributes {stable_mosaic.version = 11 : i64} {
  func.func @_mlp_kernel(%arg0: i32, %arg1: memref<128x32xbf16, #tpu.memory_space<vmem>>, %arg2: memref<32x128xbf16, #tpu.memory_space<vmem>>, %arg3: memref<1x128xf32, #tpu.memory_space<vmem>>, %arg4: memref<128x128xbf16, #tpu.memory_space<vmem>>, %arg5: memref<1x128xf32, #tpu.memory_space<vmem>>, %arg6: memref<128x128xbf16, #tpu.memory_space<vmem>>, %arg7: memref<1x128xf32, #tpu.memory_space<vmem>>, %arg8: memref<1x128xf32, #tpu.memory_space<vmem>>, %arg9: memref<1x1xf32, #tpu.memory_space<vmem>>, %arg10: memref<128x1xf32, #tpu.memory_space<vmem>>) attributes {dimension_semantics = [#tpu.dimension_semantics<parallel>], iteration_bounds = array<i64: 2>, scalar_prefetch = 0 : i64, scratch_operands = 0 : i64, tpu.core_type = #tpu.core_type<tc>, window_params = [{transform_indices = @transform_0, window_bounds = array<i64: 128, 32>}, {pipeline_mode = #tpu.pipeline_mode<synchronous>, transform_indices = @transform_1, window_bounds = array<i64: 32, 128>}, {pipeline_mode = #tpu.pipeline_mode<synchronous>, transform_indices = @transform_2, window_bounds = array<i64: 1, 128>}, {pipeline_mode = #tpu.pipeline_mode<synchronous>, transform_indices = @transform_3, window_bounds = array<i64: 128, 128>}, {pipeline_mode = #tpu.pipeline_mode<synchronous>, transform_indices = @transform_4, window_bounds = array<i64: 1, 128>}, {pipeline_mode = #tpu.pipeline_mode<synchronous>, transform_indices = @transform_5, window_bounds = array<i64: 128, 128>}, {pipeline_mode = #tpu.pipeline_mode<synchronous>, transform_indices = @transform_6, window_bounds = array<i64: 1, 128>}, {pipeline_mode = #tpu.pipeline_mode<synchronous>, transform_indices = @transform_7, window_bounds = array<i64: 1, 128>}, {pipeline_mode = #tpu.pipeline_mode<synchronous>, transform_indices = @transform_8, window_bounds = array<i64: 1, 1>}, {transform_indices = @transform_9, window_bounds = array<i64: 128, 1>}]} {
    %c0 = arith.constant 0 : index
    %c0_0 = arith.constant 0 : index
    %0 = vector.load %arg1[%c0, %c0_0] : memref<128x32xbf16, #tpu.memory_space<vmem>>, vector<128x32xbf16>
    %c0_1 = arith.constant 0 : index
    %c0_2 = arith.constant 0 : index
    %1 = vector.load %arg2[%c0_1, %c0_2] : memref<32x128xbf16, #tpu.memory_space<vmem>>, vector<32x128xbf16>
    %c0_3 = arith.constant 0 : index
    %c0_4 = arith.constant 0 : index
    %2 = vector.load %arg3[%c0_3, %c0_4] : memref<1x128xf32, #tpu.memory_space<vmem>>, vector<1x128xf32>
    %cst = arith.constant dense<0.000000e+00> : vector<128x128xf32>
    %3 = tpu.matmul %0, %1, %cst {dimension_numbers = #tpu.dot_dimension_numbers<[1], [0], [0], [1], [0, 0, 1, 1], [], []>} : vector<128x32xbf16>, vector<32x128xbf16>, vector<128x128xf32> -> vector<128x128xf32>
    %4 = vector.broadcast %2 : vector<1x128xf32> to vector<128x128xf32>
    %5 = arith.addf %3, %4 : vector<128x128xf32>
    %cst_5 = arith.constant 0.000000e+00 : f32
    %6 = vector.broadcast %cst_5 : f32 to vector<128x128xf32>
    %7 = arith.maximumf %5, %6 : vector<128x128xf32>
    %c0_6 = arith.constant 0 : index
    %c0_7 = arith.constant 0 : index
    %8 = vector.load %arg4[%c0_6, %c0_7] : memref<128x128xbf16, #tpu.memory_space<vmem>>, vector<128x128xbf16>
    %c0_8 = arith.constant 0 : index
    %c0_9 = arith.constant 0 : index
    %9 = vector.load %arg5[%c0_8, %c0_9] : memref<1x128xf32, #tpu.memory_space<vmem>>, vector<1x128xf32>
    %10 = arith.truncf %7 : vector<128x128xf32> to vector<128x128xbf16>
    %cst_10 = arith.constant dense<0.000000e+00> : vector<128x128xf32>
    %11 = tpu.matmul %10, %8, %cst_10 {dimension_numbers = #tpu.dot_dimension_numbers<[1], [0], [0], [1], [0, 0, 1, 1], [], []>} : vector<128x128xbf16>, vector<128x128xbf16>, vector<128x128xf32> -> vector<128x128xf32>
    %12 = vector.broadcast %9 : vector<1x128xf32> to vector<128x128xf32>
    %13 = arith.addf %11, %12 : vector<128x128xf32>
    %cst_11 = arith.constant 0.000000e+00 : f32
    %14 = vector.broadcast %cst_11 : f32 to vector<128x128xf32>
    %15 = arith.maximumf %13, %14 : vector<128x128xf32>
    %c0_12 = arith.constant 0 : index
    %c0_13 = arith.constant 0 : index
    %16 = vector.load %arg6[%c0_12, %c0_13] : memref<128x128xbf16, #tpu.memory_space<vmem>>, vector<128x128xbf16>
    %c0_14 = arith.constant 0 : index
    %c0_15 = arith.constant 0 : index
    %17 = vector.load %arg7[%c0_14, %c0_15] : memref<1x128xf32, #tpu.memory_space<vmem>>, vector<1x128xf32>
    %18 = arith.truncf %15 : vector<128x128xf32> to vector<128x128xbf16>
    %cst_16 = arith.constant dense<0.000000e+00> : vector<128x128xf32>
    %19 = tpu.matmul %18, %16, %cst_16 {dimension_numbers = #tpu.dot_dimension_numbers<[1], [0], [0], [1], [0, 0, 1, 1], [], []>} : vector<128x128xbf16>, vector<128x128xbf16>, vector<128x128xf32> -> vector<128x128xf32>
    %20 = vector.broadcast %17 : vector<1x128xf32> to vector<128x128xf32>
    %21 = arith.addf %19, %20 : vector<128x128xf32>
    %cst_17 = arith.constant 0.000000e+00 : f32
    %22 = vector.broadcast %cst_17 : f32 to vector<128x128xf32>
    %23 = arith.maximumf %21, %22 : vector<128x128xf32>
    %c0_18 = arith.constant 0 : index
    %c0_19 = arith.constant 0 : index
    %24 = vector.load %arg8[%c0_18, %c0_19] : memref<1x128xf32, #tpu.memory_space<vmem>>, vector<1x128xf32>
    %c0_20 = arith.constant 0 : index
    %c0_21 = arith.constant 0 : index
    %25 = vector.load %arg9[%c0_20, %c0_21] : memref<1x1xf32, #tpu.memory_space<vmem>>, vector<1x1xf32>
    %26 = vector.broadcast %24 : vector<1x128xf32> to vector<128x128xf32>
    %27 = arith.mulf %23, %26 : vector<128x128xf32>
    %cst_22 = arith.constant dense<0.000000e+00> : vector<128xf32>
    %28 = vector.multi_reduction <add>, %27, %cst_22 [1] : vector<128x128xf32> to vector<128xf32>
    %29 = vector.shape_cast %28 : vector<128xf32> to vector<128x1xf32>
    %30 = vector.broadcast %25 : vector<1x1xf32> to vector<128x1xf32>
    %31 = arith.addf %29, %30 : vector<128x1xf32>
    %c0_23 = arith.constant 0 : index
    %c0_24 = arith.constant 0 : index
    %32 = vector.load %arg10[%c0_23, %c0_24] : memref<128x1xf32, #tpu.memory_space<vmem>>, vector<128x1xf32>
    tpu.vector_store %arg10[%c0_23, %c0_24], %31 {strides = array<i32>} : memref<128x1xf32, #tpu.memory_space<vmem>>, vector<128x1xf32>,
    return
  }
  func.func @transform_0(%arg0: i32) -> (i32, i32) {
    %c0_i32 = arith.constant 0 : i32
    %c0_i32_0 = arith.constant 0 : i32
    return %arg0, %c0_i32 : i32, i32
  }
  func.func @transform_1(%arg0: i32) -> (i32, i32) {
    %c0_i32 = arith.constant 0 : i32
    %c0_i32_0 = arith.constant 0 : i32
    %c0_i32_1 = arith.constant 0 : i32
    return %c0_i32, %c0_i32_0 : i32, i32
  }
  func.func @transform_2(%arg0: i32) -> (i32, i32) {
    %c0_i32 = arith.constant 0 : i32
    %c0_i32_0 = arith.constant 0 : i32
    %c0_i32_1 = arith.constant 0 : i32
    return %c0_i32, %c0_i32_0 : i32, i32
  }
  func.func @transform_3(%arg0: i32) -> (i32, i32) {
    %c0_i32 = arith.constant 0 : i32
    %c0_i32_0 = arith.constant 0 : i32
    %c0_i32_1 = arith.constant 0 : i32
    return %c0_i32, %c0_i32_0 : i32, i32
  }
  func.func @transform_4(%arg0: i32) -> (i32, i32) {
    %c0_i32 = arith.constant 0 : i32
    %c0_i32_0 = arith.constant 0 : i32
    %c0_i32_1 = arith.constant 0 : i32
    return %c0_i32, %c0_i32_0 : i32, i32
  }
  func.func @transform_5(%arg0: i32) -> (i32, i32) {
    %c0_i32 = arith.constant 0 : i32
    %c0_i32_0 = arith.constant 0 : i32
    %c0_i32_1 = arith.constant 0 : i32
    return %c0_i32, %c0_i32_0 : i32, i32
  }
  func.func @transform_6(%arg0: i32) -> (i32, i32) {
    %c0_i32 = arith.constant 0 : i32
    %c0_i32_0 = arith.constant 0 : i32
    %c0_i32_1 = arith.constant 0 : i32
    return %c0_i32, %c0_i32_0 : i32, i32
  }
  func.func @transform_7(%arg0: i32) -> (i32, i32) {
    %c0_i32 = arith.constant 0 : i32
    %c0_i32_0 = arith.constant 0 : i32
    %c0_i32_1 = arith.constant 0 : i32
    return %c0_i32, %c0_i32_0 : i32, i32
  }
  func.func @transform_8(%arg0: i32) -> (i32, i32) {
    %c0_i32 = arith.constant 0 : i32
    %c0_i32_0 = arith.constant 0 : i32
    %c0_i32_1 = arith.constant 0 : i32
    return %c0_i32, %c0_i32_0 : i32, i32
  }
  func.func @transform_9(%arg0: i32) -> (i32, i32) {
    %c0_i32 = arith.constant 0 : i32
    %c0_i32_0 = arith.constant 0 : i32
    return %arg0, %c0_i32 : i32, i32
  }
}

</mosaic_0001>

<llo_original>
// kernel: _forward_impl.1
$region0: #{_forward_impl.1}
  #allocation0 [shape = 'u32[]', space=smem, size = 0x4, offset = 0x4, fixed_abs, tag = 'smem constant byte address 0x4 - core index']
  #allocation1 [shape = 'u32[144,128]{1,0:T(1,128)}', space=vmem, size = 0x12000, scoped, tag = 'internal scratch']
  #allocation2 [shape = 'f32[1,1]{1,0:T(1,128)S(1)}', space=vmem, size = 0x200, scoped, tag = 'scoped memory for _forward_impl.1']
  %s0 = inlined_call_operand.vmem [shape: bf16[256,32], index: 0, kind: input, shape index: {}]
  %s1 = inlined_call_operand.vmem [shape: bf16[32,128], index: 1, kind: input, shape index: {}]
  %s2 = inlined_call_operand.vmem [shape: f32[1,128], index: 2, kind: input, shape index: {}]
  %s3 = inlined_call_operand.vmem [shape: bf16[128,128], index: 3, kind: input, shape index: {}]
  %s4 = inlined_call_operand.vmem [shape: f32[1,128], index: 4, kind: input, shape index: {}]
  %s5 = inlined_call_operand.vmem [shape: bf16[128,128], index: 5, kind: input, shape index: {}]
  %s6 = inlined_call_operand.vmem [shape: f32[1,128], index: 6, kind: input, shape index: {}]
  %s7 = inlined_call_operand.vmem [shape: f32[1,128], index: 7, kind: input, shape index: {}]
  %s8 = inlined_call_operand.<no memory space> [shape: f32[1,1], index: 8, kind: input, shape index: {}]
  %s9 = inlined_call_operand.vmem [shape: f32[256,1], index: 9, kind: output, shape index: {}]
  %s10 = sld [smem:[#allocation0]]
  $region69: #{_forward_impl.1} parent=0
    _
  %s12 = ssub.s32 1, %s10
  %s13 = scalar_select 0, %s12, %s10
  %v14 = vstv %s8
  %15 = vst [vmem:[#allocation2] sm:$0x1] %v14
  loop: start=0, step=1, limit=4
  $region2: #{_forward_impl.1} parent=0 // loop_pre_header
    _
  $region3: #{_forward_impl.1} parent=0 // loop_header
    %s17 = sphi 0, %s21
    %p18 = scmp.ge.s32.totalorder %s17, 4
    %s27 = sphi 0, %s29
    %s30 = sphi 0, %s27
    %s31 = sphi 0, %s30
    %s47 = sphi 0, %s31
    %s51 = sphi 0, %s51
    %s53 = sphi 0, %s51
    %s54 = sphi 0, %s53
    %s68 = sphi 0, %s54
    %s72 = sphi 0, %s72
    %s74 = sphi 0, %s72
    %s75 = sphi 0, %s74
    %s89 = sphi 0, %s75
    %s93 = sphi 0, %s93
    %s95 = sphi 0, %s93
    %s96 = sphi 0, %s95
    %s110 = sphi 0, %s96
    %s114 = sphi 0, %s114
    %s116 = sphi 0, %s114
    %s117 = sphi 0, %s116
    %s131 = sphi 0, %s117
    %s135 = sphi 0, %s135
    %s137 = sphi 0, %s135
    %s138 = sphi 0, %s137
    %s152 = sphi 0, %s138
    %s156 = sphi 0, %s156
    %s158 = sphi 0, %s156
    %s159 = sphi 0, %s158
    %s173 = sphi 0, %s159
    %s177 = sphi 0, %s177
    %s179 = sphi 0, %s177
    %s180 = sphi 0, %s179
    %s194 = sphi 0, %s180
    %s198 = sphi 0, %s198
    %s200 = sphi 0, %s198
    %s201 = sphi 0, %s200
    %s215 = sphi 0, %s201
    %s221 = sphi 0, %s223
    %s224 = sphi 0, %s221
    %s225 = sphi 0, %s224
    %s241 = sphi 0, %s225
  $region4: #{_forward_impl.1} parent=0 // loop_header_branch
    %20 = sbr.rel (%p18) target = $region8
  $region5: #{_forward_impl.1} parent=0 // loop_body
    %s22 = ssub.s32 %s17, 1
    %s23 = ssub.s32 %s17, 2
    %s24 = sadd.s32 %s17, 1
    %s25 = ssub.s32 %s17, %s24
    %p26 = scmp.eq.s32.totalorder %s25, 0
    %s28 = sadd.s32 %s27, 1
    %s29 = scalar_select %p26, %s27, %s28
    %p32 = pneg %p26
    %p33 = scmp.eq.s32.totalorder %s17, 1
    %p34 = por %p32, %p33
    %p35 = scmp.ne.s32.totalorder %s27, %s30
    %p36 = scmp.eq.s32.totalorder %s17, 0
    %p37 = por %p35, %p36
    %p38 = scmp.ne.s32.totalorder %s27, %s30
    %p39 = scmp.eq.s32.totalorder %s22, 1
    %p40 = por %p38, %p39
    %p41 = scmp.ne.s32.totalorder %s30, %s31
    %p42 = scmp.eq.s32.totalorder %s22, 0
    %p43 = por %p41, %p42
    %p44 = scmp.ne.s32.totalorder %s30, %s31
    %p45 = scmp.eq.s32.totalorder %s23, 1
    %p46 = por %p44, %p45
    %p48 = scmp.ne.s32.totalorder %s31, %s47
    %p49 = scmp.eq.s32.totalorder %s23, 0
    %p50 = por %p48, %p49
    %s52 = sadd.s32 %s51, 1
    %p55 = scmp.eq.s32.totalorder %s17, 1
    %p56 = scmp.ne.s32.totalorder %s51, %s53
    %p57 = scmp.eq.s32.totalorder %s17, 0
    %p58 = por %p56, %p57
    %p59 = scmp.ne.s32.totalorder %s51, %s53
    %p60 = scmp.eq.s32.totalorder %s22, 1
    %p61 = por %p59, %p60
    %p62 = scmp.ne.s32.totalorder %s53, %s54
    %p63 = scmp.eq.s32.totalorder %s22, 0
    %p64 = por %p62, %p63
    %p65 = scmp.ne.s32.totalorder %s53, %s54
    %p66 = scmp.eq.s32.totalorder %s23, 1
    %p67 = por %p65, %p66
    %p69 = scmp.ne.s32.totalorder %s54, %s68
    %p70 = scmp.eq.s32.totalorder %s23, 0
    %p71 = por %p69, %p70
    %s73 = sadd.s32 %s72, 1
    %p76 = scmp.eq.s32.totalorder %s17, 1
    %p77 = scmp.ne.s32.totalorder %s72, %s74
    %p78 = scmp.eq.s32.totalorder %s17, 0
    %p79 = por %p77, %p78
    %p80 = scmp.ne.s32.totalorder %s72, %s74
    %p81 = scmp.eq.s32.totalorder %s22, 1
    %p82 = por %p80, %p81
    %p83 = scmp.ne.s32.totalorder %s74, %s75
    %p84 = scmp.eq.s32.totalorder %s22, 0
    %p85 = por %p83, %p84
    %p86 = scmp.ne.s32.totalorder %s74, %s75
    %p87 = scmp.eq.s32.totalorder %s23, 1
    %p88 = por %p86, %p87
    %p90 = scmp.ne.s32.totalorder %s75, %s89
    %p91 = scmp.eq.s32.totalorder %s23, 0
    %p92 = por %p90, %p91
    %s94 = sadd.s32 %s93, 1
    %p97 = scmp.eq.s32.totalorder %s17, 1
    %p98 = scmp.ne.s32.totalorder %s93, %s95
    %p99 = scmp.eq.s32.totalorder %s17, 0
    %p100 = por %p98, %p99
    %p101 = scmp.ne.s32.totalorder %s93, %s95
    %p102 = scmp.eq.s32.totalorder %s22, 1
    %p103 = por %p101, %p102
    %p104 = scmp.ne.s32.totalorder %s95, %s96
    %p105 = scmp.eq.s32.totalorder %s22, 0
    %p106 = por %p104, %p105
    %p107 = scmp.ne.s32.totalorder %s95, %s96
    %p108 = scmp.eq.s32.totalorder %s23, 1
    %p109 = por %p107, %p108
    %p111 = scmp.ne.s32.totalorder %s96, %s110
    %p112 = scmp.eq.s32.totalorder %s23, 0
    %p113 = por %p111, %p112
    %s115 = sadd.s32 %s114, 1
    %p118 = scmp.eq.s32.totalorder %s17, 1
    %p119 = scmp.ne.s32.totalorder %s114, %s116
    %p120 = scmp.eq.s32.totalorder %s17, 0
    %p121 = por %p119, %p120
    %p122 = scmp.ne.s32.totalorder %s114, %s116
    %p123 = scmp.eq.s32.totalorder %s22, 1
    %p124 = por %p122, %p123
    %p125 = scmp.ne.s32.totalorder %s116, %s117
    %p126 = scmp.eq.s32.totalorder %s22, 0
    %p127 = por %p125, %p126
    %p128 = scmp.ne.s32.totalorder %s116, %s117
    %p129 = scmp.eq.s32.totalorder %s23, 1
    %p130 = por %p128, %p129
    %p132 = scmp.ne.s32.totalorder %s117, %s131
    %p133 = scmp.eq.s32.totalorder %s23, 0
    %p134 = por %p132, %p133
    %s136 = sadd.s32 %s135, 1
    %p139 = scmp.eq.s32.totalorder %s17, 1
    %p140 = scmp.ne.s32.totalorder %s135, %s137
    %p141 = scmp.eq.s32.totalorder %s17, 0
    %p142 = por %p140, %p141
    %p143 = scmp.ne.s32.totalorder %s135, %s137
    %p144 = scmp.eq.s32.totalorder %s22, 1
    %p145 = por %p143, %p144
    %p146 = scmp.ne.s32.totalorder %s137, %s138
    %p147 = scmp.eq.s32.totalorder %s22, 0
    %p148 = por %p146, %p147
    %p149 = scmp.ne.s32.totalorder %s137, %s138
    %p150 = scmp.eq.s32.totalorder %s23, 1
    %p151 = por %p149, %p150
    %p153 = scmp.ne.s32.totalorder %s138, %s152
    %p154 = scmp.eq.s32.totalorder %s23, 0
    %p155 = por %p153, %p154
    %s157 = sadd.s32 %s156, 1
    %p160 = scmp.eq.s32.totalorder %s17, 1
    %p161 = scmp.ne.s32.totalorder %s156, %s158
    %p162 = scmp.eq.s32.totalorder %s17, 0
    %p163 = por %p161, %p162
    %p164 = scmp.ne.s32.totalorder %s156, %s158
    %p165 = scmp.eq.s32.totalorder %s22, 1
    %p166 = por %p164, %p165
    %p167 = scmp.ne.s32.totalorder %s158, %s159
    %p168 = scmp.eq.s32.totalorder %s22, 0
    %p169 = por %p167, %p168
    %p170 = scmp.ne.s32.totalorder %s158, %s159
    %p171 = scmp.eq.s32.totalorder %s23, 1
    %p172 = por %p170, %p171
    %p174 = scmp.ne.s32.totalorder %s159, %s173
    %p175 = scmp.eq.s32.totalorder %s23, 0
    %p176 = por %p174, %p175
    %s178 = sadd.s32 %s177, 1
    %p181 = scmp.eq.s32.totalorder %s17, 1
    %p182 = scmp.ne.s32.totalorder %s177, %s179
    %p183 = scmp.eq.s32.totalorder %s17, 0
    %p184 = por %p182, %p183
    %p185 = scmp.ne.s32.totalorder %s177, %s179
    %p186 = scmp.eq.s32.totalorder %s22, 1
    %p187 = por %p185, %p186
    %p188 = scmp.ne.s32.totalorder %s179, %s180
    %p189 = scmp.eq.s32.totalorder %s22, 0
    %p190 = por %p188, %p189
    %p191 = scmp.ne.s32.totalorder %s179, %s180
    %p192 = scmp.eq.s32.totalorder %s23, 1
    %p193 = por %p191, %p192
    %p195 = scmp.ne.s32.totalorder %s180, %s194
    %p196 = scmp.eq.s32.totalorder %s23, 0
    %p197 = por %p195, %p196
    %s199 = sadd.s32 %s198, 1
    %p202 = scmp.eq.s32.totalorder %s17, 1
    %p203 = scmp.ne.s32.totalorder %s198, %s200
    %p204 = scmp.eq.s32.totalorder %s17, 0
    %p205 = por %p203, %p204
    %p206 = scmp.ne.s32.totalorder %s198, %s200
    %p207 = scmp.eq.s32.totalorder %s22, 1
    %p208 = por %p206, %p207
    %p209 = scmp.ne.s32.totalorder %s200, %s201
    %p210 = scmp.eq.s32.totalorder %s22, 0
    %p211 = por %p209, %p210
    %p212 = scmp.ne.s32.totalorder %s200, %s201
    %p213 = scmp.eq.s32.totalorder %s23, 1
    %p214 = por %p212, %p213
    %p216 = scmp.ne.s32.totalorder %s201, %s215
    %p217 = scmp.eq.s32.totalorder %s23, 0
    %p218 = por %p216, %p217
    %s219 = ssub.s32 %s17, %s24
    %p220 = scmp.eq.s32.totalorder %s219, 0
    %s222 = sadd.s32 %s221, 1
    %s223 = scalar_select %p220, %s221, %s222
    %p226 = pneg %p220
    %p227 = scmp.eq.s32.totalorder %s17, 1
    %p228 = por %p226, %p227
    %p229 = scmp.ne.s32.totalorder %s221, %s224
    %p230 = scmp.eq.s32.totalorder %s17, 0
    %p231 = por %p229, %p230
    %p232 = scmp.ne.s32.totalorder %s221, %s224
    %p233 = scmp.eq.s32.totalorder %s22, 1
    %p234 = por %p232, %p233
    %p235 = scmp.ne.s32.totalorder %s224, %s225
    %p236 = scmp.eq.s32.totalorder %s22, 0
    %p237 = por %p235, %p236
    %p238 = scmp.ne.s32.totalorder %s224, %s225
    %p239 = scmp.eq.s32.totalorder %s23, 1
    %p240 = por %p238, %p239
    %p242 = scmp.ne.s32.totalorder %s225, %s241
    %p243 = scmp.eq.s32.totalorder %s23, 0
    %p244 = por %p242, %p243
    %p245 = scmp.le.s32.totalorder 1, %s17
    %p246 = scmp.lt.s32.totalorder %s17, 3
    %p247 = pnand %p245, %p246
    %p248 = pneg %p247
    // Predicated region
    $region9: #{_forward_impl.1} parent=5 // pred_check
      _
    $region10: #{_forward_impl.1} parent=5 // pred_check_branch
      %250 = sbr.rel (%p247) target = $region12
    $region11: #{_forward_impl.1} parent=5 // pred_region
      %s251 = ssub.s32 %s17, 1
      // Predicated region
      $region13: #{_forward_impl.1} parent=11 // pred_check
        %p252 = pneg %p64
      $region14: #{_forward_impl.1} parent=11 // pred_check_branch
        %254 = sbr.rel (%p252) target = $region16
      $region15: #{_forward_impl.1} parent=11 // pred_region
        _
      $region16: #{_forward_impl.1} parent=11 // pred_fallthru
        _
      // Predicated region
      $region17: #{_forward_impl.1} parent=11 // pred_check
        %p255 = pneg %p85
      $region18: #{_forward_impl.1} parent=11 // pred_check_branch
        %257 = sbr.rel (%p255) target = $region20
      $region19: #{_forward_impl.1} parent=11 // pred_region
        _
      $region20: #{_forward_impl.1} parent=11 // pred_fallthru
        _
      // Predicated region
      $region21: #{_forward_impl.1} parent=11 // pred_check
        %p258 = pneg %p106
      $region22: #{_forward_impl.1} parent=11 // pred_check_branch
        %260 = sbr.rel (%p258) target = $region24
      $region23: #{_forward_impl.1} parent=11 // pred_region
        _
      $region24: #{_forward_impl.1} parent=11 // pred_fallthru
        _
      // Predicated region
      $region25: #{_forward_impl.1} parent=11 // pred_check
        %p261 = pneg %p127
      $region26: #{_forward_impl.1} parent=11 // pred_check_branch
        %263 = sbr.rel (%p261) target = $region28
      $region27: #{_forward_impl.1} parent=11 // pred_region
        _
      $region28: #{_forward_impl.1} parent=11 // pred_fallthru
        _
      // Predicated region
      $region29: #{_forward_impl.1} parent=11 // pred_check
        %p264 = pneg %p148
      $region30: #{_forward_impl.1} parent=11 // pred_check_branch
        %266 = sbr.rel (%p264) target = $region32
      $region31: #{_forward_impl.1} parent=11 // pred_region
        _
      $region32: #{_forward_impl.1} parent=11 // pred_fallthru
        _
      // Predicated region
      $region33: #{_forward_impl.1} parent=11 // pred_check
        %p267 = pneg %p169
      $region34: #{_forward_impl.1} parent=11 // pred_check_branch
        %269 = sbr.rel (%p267) target = $region36
      $region35: #{_forward_impl.1} parent=11 // pred_region
        _
      $region36: #{_forward_impl.1} parent=11 // pred_fallthru
        _
      // Predicated region
      $region37: #{_forward_impl.1} parent=11 // pred_check
        %p270 = pneg %p190
      $region38: #{_forward_impl.1} parent=11 // pred_check_branch
        %272 = sbr.rel (%p270) target = $region40
      $region39: #{_forward_impl.1} parent=11 // pred_region
        _
      $region40: #{_forward_impl.1} parent=11 // pred_fallthru
        _
      // Predicated region
      $region41: #{_forward_impl.1} parent=11 // pred_check
        %p273 = pneg %p211
      $region42: #{_forward_impl.1} parent=11 // pred_check_branch
        %275 = sbr.rel (%p273) target = $region44
      $region43: #{_forward_impl.1} parent=11 // pred_region
        _
      $region44: #{_forward_impl.1} parent=11 // pred_fallthru
        _
    $region12: #{_forward_impl.1} parent=5 // pred_fallthru
      _
    %p276 = scmp.lt.s32.totalorder %s17, 2
    // Predicated region
    $region45: #{_forward_impl.1} parent=5 // pred_check
      %p277 = pneg %p276
    $region46: #{_forward_impl.1} parent=5 // pred_check_branch
      %279 = sbr.rel (%p277) target = $region48
    $region47: #{_forward_impl.1} parent=5 // pred_region
      // Predicated region
      $region49: #{_forward_impl.1} parent=47 // pred_check
        %p280 = pneg %p37
      $region50: #{_forward_impl.1} parent=47 // pred_check_branch
        %282 = sbr.rel (%p280) target = $region52
      $region51: #{_forward_impl.1} parent=47 // pred_region
        %s283 = smul.u32 16, %s17
        %p284 = scmp.lt.s32.totalorder %s283, 31
        %s285 = scalar_select %p284, %s283, 31
        %s286 = smul.addr %s285, 4
        %s287 = scalar_lea.vmem %s0, %s286
        %s288 = smul.u32 16, %s17
      $region52: #{_forward_impl.1} parent=47 // pred_fallthru
        _
    $region48: #{_forward_impl.1} parent=5 // pred_fallthru
      _
    %p289 = scmp.le.s32.totalorder 1, %s17
    %p290 = scmp.lt.s32.totalorder %s17, 3
    %p291 = pnand %p289, %p290
    %p292 = pneg %p291
    // Predicated region
    $region53: #{_forward_impl.1} parent=5 // pred_check
      _
    $region54: #{_forward_impl.1} parent=5 // pred_check_branch
      %294 = sbr.rel (%p291) target = $region56
    $region55: #{_forward_impl.1} parent=5 // pred_region
      %s295 = ssub.s32 %s17, 1
      %s296 = smul.u32 16, %s22
      %p297 = scmp.lt.s32.totalorder %s296, 31
      %s298 = scalar_select %p297, %s296, 31
      %s299 = smul.addr %s298, 4
      %s300 = scalar_lea.vmem %s0, %s299
      %p301 = pneg %p43
      %p302 = pneg %p40
      %p303 = pneg %p64
      %p304 = pneg %p61
      %p305 = pneg %p85
      %p306 = pneg %p82
      %p307 = pneg %p106
      %p308 = pneg %p103
      %p309 = pneg %p127
      %p310 = pneg %p124
      %p311 = pneg %p148
      %p312 = pneg %p145
      %p313 = pneg %p169
      %p314 = pneg %p166
      %p315 = pneg %p190
      %p316 = pneg %p187
      %p317 = pneg %p211
      %p318 = pneg %p208
      %p319 = pneg %p237
      %p320 = pneg %p234
      %s321 = smul.u32 16, %s22
      %p322 = scmp.lt.s32.totalorder %s321, 31
      %s323 = scalar_select %p322, %s321, 31
      %s324 = smul.addr %s323, 8
      %s325 = scalar_lea.vmem %s9, %s324
      %s326 = smul.u32 16, %s22
      %p327 = scmp.lt.s32.totalorder %s326, 31
      %s328 = scalar_select %p327, %s326, 31
      %s329 = smul.addr %s328, 4
      %s330 = scalar_lea.vmem %s0, %s329
      %s331 = smul.u32 16, %s22
      %s332 = smul.u32 16, %s22
      %p333 = scmp.lt.s32.totalorder %s332, 31
      %s334 = scalar_select %p333, %s332, 31
      %s335 = smul.addr %s334, 8
      %s336 = scalar_lea.vmem %s9, %s335
      %s337 = smul.u32 16, %s22
      %v339 = vld [vmem:[%s330] sm:$0xf]
      %v340 = vld [vmem:[%s330 + $0x4] sm:$0xf]
      %v341 = vld [vmem:[%s330 + $0x8] sm:$0xf]
      %v342 = vld [vmem:[%s330 + $0xc] sm:$0xf]
      %v343 = vld [vmem:[%s330 + $0x10] sm:$0xf]
      %v344 = vld [vmem:[%s330 + $0x14] sm:$0xf]
      %v345 = vld [vmem:[%s330 + $0x18] sm:$0xf]
      %v346 = vld [vmem:[%s330 + $0x1c] sm:$0xf]
      %v347 = vld [vmem:[%s330 + $0x20] sm:$0xf]
      %v348 = vld [vmem:[%s330 + $0x24] sm:$0xf]
      %v349 = vld [vmem:[%s330 + $0x28] sm:$0xf]
      %v350 = vld [vmem:[%s330 + $0x2c] sm:$0xf]
      %v351 = vld [vmem:[%s330 + $0x30] sm:$0xf]
      %v352 = vld [vmem:[%s330 + $0x34] sm:$0xf]
      %v353 = vld [vmem:[%s330 + $0x38] sm:$0xf]
      %v354 = vld [vmem:[%s330 + $0x3c] sm:$0xf]
      %v355 = vld [vmem:[%s1] sm:$0xf]
      %v356 = vld [vmem:[%s1 + $0x4] sm:$0xf]
      %v357 = vld [vmem:[%s1 + $0x8] sm:$0xf]
      %v358 = vld [vmem:[%s1 + $0xc] sm:$0xf]
      %v359 = vld [vmem:[%s2] sm:$0x1]
      %v361 = vlaneseq
      %v362 = vshrl.u32 %v361, 7
      %v363 = vsub.s32 0, %v362
      %v364 = vrot.slane %v359, %v363
      %v382 = vunpack.c.l.b16 %v339
      %v383 = vunpack.c.l.b16 %v340
      %v384 = vunpack.c.l.b16 %v341
      %v385 = vunpack.c.l.b16 %v342
      %v386 = vunpack.c.l.b16 %v343
      %v387 = vunpack.c.l.b16 %v344
      %v388 = vunpack.c.l.b16 %v345
      %v389 = vunpack.c.l.b16 %v346
      %v390 = vunpack.c.l.b16 %v347
      %v391 = vunpack.c.l.b16 %v348
      %v392 = vunpack.c.l.b16 %v349
      %v393 = vunpack.c.l.b16 %v350
      %v394 = vunpack.c.l.b16 %v351
      %v395 = vunpack.c.l.b16 %v352
      %v396 = vunpack.c.l.b16 %v353
      %v397 = vunpack.c.l.b16 %v354
      %v398 = vpack.c.b16 %v383, %v382
      %v399 = vpack.c.b16 %v385, %v384
      %v400 = vpack.c.b16 %v387, %v386
      %v401 = vpack.c.b16 %v389, %v388
      %v402 = vpack.c.b16 %v391, %v390
      %v403 = vpack.c.b16 %v393, %v392
      %v404 = vpack.c.b16 %v395, %v394
      %v405 = vpack.c.b16 %v397, %v396
      %v410 = vunpack.c.l.b16 %v355
      %v411 = vunpack.c.l.b16 %v356
      %v412 = vunpack.c.l.b16 %v357
      %v413 = vunpack.c.l.b16 %v358
      %v414 = vpack.c.b16 %v411, %v410
      %v415 = vpack.c.b16 %v413, %v412
      %vm418 = vcmask 261120
      %v420 = vsel %vm418, %v398, 0
      %v423 = vsel %vm418, %v399, 0
      %v426 = vsel %vm418, %v400, 0
      %v429 = vsel %vm418, %v401, 0
      %v432 = vsel %vm418, %v402, 0
      %v435 = vsel %vm418, %v403, 0
      %v438 = vsel %vm418, %v404, 0
      %v441 = vsel %vm418, %v405, 0
      %443 = vmatprep.subr.bf16.mxu0 0
      %444 = vmatpush1.bf16.msra.mxu0 %v414
      %445 = vmatprep.subr.bf16.mxu0 0
      %446 = vmatpush1.bf16.msra.mxu0 %v415
      %447 = vmatprep.subr.bf16.mxu0 0
      %448 = vmatpush1.bf16.msra.mxu0 0
      %449 = vmatprep.subr.bf16.mxu0 0
      %450 = vmatpush1.bf16.msra.mxu0 0
      %451 = vmatprep.subr.bf16.mxu0 0
      %452 = vmatpush1.bf16.msra.mxu0 0
      %453 = vmatprep.subr.bf16.mxu0 0
      %454 = vmatpush1.bf16.msra.mxu0 0
      %455 = vmatprep.subr.bf16.mxu0 0
      %456 = vmatpush1.bf16.msra.mxu0 0
      %457 = vmatprep.subr.bf16.mxu0 0
      %458 = vmatpush1.bf16.msra.mxu0 0
      %459 = vmatprep.subr.bf16.mxu0 0
      %460 = vmatpush1.bf16.msra.mxu0 0
      %461 = vmatprep.subr.bf16.mxu0 0
      %462 = vmatpush1.bf16.msra.mxu0 0
      %463 = vmatprep.subr.bf16.mxu0 0
      %464 = vmatpush1.bf16.msra.mxu0 0
      %465 = vmatprep.subr.bf16.mxu0 0
      %466 = vmatpush1.bf16.msra.mxu0 0
      %467 = vmatprep.subr.bf16.mxu0 0
      %468 = vmatpush1.bf16.msra.mxu0 0
      %469 = vmatprep.subr.bf16.mxu0 0
      %470 = vmatpush1.bf16.msra.mxu0 0
      %471 = vmatprep.subr.bf16.mxu0 0
      %472 = vmatpush1.bf16.msra.mxu0 0
      %473 = vmatprep.subr.bf16.mxu0 0
      %474 = vmatpush1.bf16.msra.mxu0 0
      %475 = vmatprep.mubr.bf16.mxu0 0
      %476 = vmatmul.mubr.bf16.gmra.mrb[0].mxu0 %v420
      %v477 = vpop.f32.mrb[0].mxu0
      %v478 = vadd.f32 %v364, %v477
      %v479 = vpop.f32.mrb[0].mxu0
      %v480 = vpop.f32.mrb[0].mxu0
      %v481 = vadd.f32 %v364, %v480
      %v482 = vpop.f32.mrb[0].mxu0
      %483 = vmatprep.mubr.bf16.mxu0 0
      %484 = vmatmul.mubr.bf16.gmra.mrb[0].mxu0 %v423
      %v485 = vpop.f32.mrb[0].mxu0
      %v486 = vadd.f32 %v364, %v485
      %v487 = vpop.f32.mrb[0].mxu0
      %v488 = vpop.f32.mrb[0].mxu0
      %v489 = vadd.f32 %v364, %v488
      %v490 = vpop.f32.mrb[0].mxu0
      %491 = vmatprep.mubr.bf16.mxu0 0
      %492 = vmatmul.mubr.bf16.gmra.mrb[0].mxu0 %v426
      %v493 = vpop.f32.mrb[0].mxu0
      %v494 = vadd.f32 %v364, %v493
      %v495 = vpop.f32.mrb[0].mxu0
      %v496 = vpop.f32.mrb[0].mxu0
      %v497 = vadd.f32 %v364, %v496
      %v498 = vpop.f32.mrb[0].mxu0
      %499 = vmatprep.mubr.bf16.mxu0 0
      %500 = vmatmul.mubr.bf16.gmra.mrb[0].mxu0 %v429
      %v501 = vpop.f32.mrb[0].mxu0
      %v502 = vadd.f32 %v364, %v501
      %v503 = vpop.f32.mrb[0].mxu0
      %v504 = vpop.f32.mrb[0].mxu0
      %v505 = vadd.f32 %v364, %v504
      %v506 = vpop.f32.mrb[0].mxu0
      %507 = vmatprep.mubr.bf16.mxu0 0
      %508 = vmatmul.mubr.bf16.gmra.mrb[0].mxu0 %v432
      %v509 = vpop.f32.mrb[0].mxu0
      %v510 = vadd.f32 %v364, %v509
      %v511 = vpop.f32.mrb[0].mxu0
      %v512 = vpop.f32.mrb[0].mxu0
      %v513 = vadd.f32 %v364, %v512
      %v514 = vpop.f32.mrb[0].mxu0
      %515 = vmatprep.mubr.bf16.mxu0 0
      %516 = vmatmul.mubr.bf16.gmra.mrb[0].mxu0 %v435
      %v517 = vpop.f32.mrb[0].mxu0
      %v518 = vadd.f32 %v364, %v517
      %v519 = vpop.f32.mrb[0].mxu0
      %v520 = vpop.f32.mrb[0].mxu0
      %v521 = vadd.f32 %v364, %v520
      %v522 = vpop.f32.mrb[0].mxu0
      %523 = vmatprep.mubr.bf16.mxu0 0
      %524 = vmatmul.mubr.bf16.gmra.mrb[0].mxu0 %v438
      %v525 = vpop.f32.mrb[0].mxu0
      %v526 = vadd.f32 %v364, %v525
      %v527 = vpop.f32.mrb[0].mxu0
      %v528 = vpop.f32.mrb[0].mxu0
      %v529 = vadd.f32 %v364, %v528
      %v530 = vpop.f32.mrb[0].mxu0
      %531 = vmatprep.mubr.bf16.mxu0 0
      %532 = vmatmul.mubr.bf16.gmra.mrb[0].mxu0 %v441
      %v533 = vpop.f32.mrb[0].mxu0
      %v534 = vadd.f32 %v364, %v533
      %v535 = vpop.f32.mrb[0].mxu0
      %v536 = vpop.f32.mrb[0].mxu0
      %v537 = vadd.f32 %v364, %v536
      %v538 = vpop.f32.mrb[0].mxu0
      %539 = vdwg.mxu0
      %v540 = vmax.f32 %v478, 0.0
      %v541 = vmax.f32 %v481, 0.0
      %v542 = vmax.f32 %v486, 0.0
      %v543 = vmax.f32 %v489, 0.0
      %v544 = vmax.f32 %v494, 0.0
      %v545 = vmax.f32 %v497, 0.0
      %v546 = vmax.f32 %v502, 0.0
      %v547 = vmax.f32 %v505, 0.0
      %v548 = vmax.f32 %v510, 0.0
      %v549 = vmax.f32 %v513, 0.0
      %v550 = vmax.f32 %v518, 0.0
      %v551 = vmax.f32 %v521, 0.0
      %v552 = vmax.f32 %v526, 0.0
      %v553 = vmax.f32 %v529, 0.0
      %v554 = vmax.f32 %v534, 0.0
      %v555 = vmax.f32 %v537, 0.0
      %v556 = vld [vmem:[%s3] sm:$0xf]
      %v557 = vld [vmem:[%s3 + $0x4] sm:$0xf]
      %v558 = vld [vmem:[%s3 + $0x8] sm:$0xf]
      %v559 = vld [vmem:[%s3 + $0xc] sm:$0xf]
      %v560 = vld [vmem:[%s3 + $0x10] sm:$0xf]
      %v561 = vld [vmem:[%s3 + $0x14] sm:$0xf]
      %v562 = vld [vmem:[%s3 + $0x18] sm:$0xf]
      %v563 = vld [vmem:[%s3 + $0x1c] sm:$0xf]
      %v564 = vld [vmem:[%s3 + $0x20] sm:$0xf]
      %v565 = vld [vmem:[%s3 + $0x24] sm:$0xf]
      %v566 = vld [vmem:[%s3 + $0x28] sm:$0xf]
      %v567 = vld [vmem:[%s3 + $0x2c] sm:$0xf]
      %v568 = vld [vmem:[%s3 + $0x30] sm:$0xf]
      %v569 = vld [vmem:[%s3 + $0x34] sm:$0xf]
      %v570 = vld [vmem:[%s3 + $0x38] sm:$0xf]
      %v571 = vld [vmem:[%s3 + $0x3c] sm:$0xf]
      %v572 = vld [vmem:[%s4] sm:$0x1]
      %v573 = vpack.c.bf16 %v541, %v540
      %v574 = vpack.c.bf16 %v543, %v542
      %v575 = vpack.c.bf16 %v545, %v544
      %v576 = vpack.c.bf16 %v547, %v546
      %v577 = vpack.c.bf16 %v549, %v548
      %v578 = vpack.c.bf16 %v551, %v550
      %v579 = vpack.c.bf16 %v553, %v552
      %v580 = vpack.c.bf16 %v555, %v554
      %v582 = vlaneseq
      %v583 = vshrl.u32 %v582, 7
      %v584 = vsub.s32 0, %v583
      %v585 = vrot.slane %v572, %v584
      %v603 = vunpack.c.l.b16 %v556
      %v604 = vunpack.c.l.b16 %v557
      %v605 = vunpack.c.l.b16 %v558
      %v606 = vunpack.c.l.b16 %v559
      %v607 = vunpack.c.l.b16 %v560
      %v608 = vunpack.c.l.b16 %v561
      %v609 = vunpack.c.l.b16 %v562
      %v610 = vunpack.c.l.b16 %v563
      %v611 = vunpack.c.l.b16 %v564
      %v612 = vunpack.c.l.b16 %v565
      %v613 = vunpack.c.l.b16 %v566
      %v614 = vunpack.c.l.b16 %v567
      %v615 = vunpack.c.l.b16 %v568
      %v616 = vunpack.c.l.b16 %v569
      %v617 = vunpack.c.l.b16 %v570
      %v618 = vunpack.c.l.b16 %v571
      %v619 = vpack.c.b16 %v604, %v603
      %v620 = vpack.c.b16 %v606, %v605
      %v621 = vpack.c.b16 %v608, %v607
      %v622 = vpack.c.b16 %v610, %v609
      %v623 = vpack.c.b16 %v612, %v611
      %v624 = vpack.c.b16 %v614, %v613
      %v625 = vpack.c.b16 %v616, %v615
      %v626 = vpack.c.b16 %v618, %v617
      %635 = vmatprep.subr.bf16.mxu0 0
      %636 = vmatpush1.bf16.msra.mxu0 %v619
      %637 = vmatprep.subr.bf16.mxu0 0
      %638 = vmatpush1.bf16.msra.mxu0 %v620
      %639 = vmatprep.subr.bf16.mxu0 0
      %640 = vmatpush1.bf16.msra.mxu0 %v621
      %641 = vmatprep.subr.bf16.mxu0 0
      %642 = vmatpush1.bf16.msra.mxu0 %v622
      %643 = vmatprep.subr.bf16.mxu0 0
      %644 = vmatpush1.bf16.msra.mxu0 %v623
      %645 = vmatprep.subr.bf16.mxu0 0
      %646 = vmatpush1.bf16.msra.mxu0 %v624
      %647 = vmatprep.subr.bf16.mxu0 0
      %648 = vmatpush1.bf16.msra.mxu0 %v625
      %649 = vmatprep.subr.bf16.mxu0 0
      %650 = vmatpush1.bf16.msra.mxu0 %v626
      %651 = vmatprep.subr.bf16.mxu0 0
      %652 = vmatpush1.bf16.msra.mxu0 0
      %653 = vmatprep.subr.bf16.mxu0 0
      %654 = vmatpush1.bf16.msra.mxu0 0
      %655 = vmatprep.subr.bf16.mxu0 0
      %656 = vmatpush1.bf16.msra.mxu0 0
      %657 = vmatprep.subr.bf16.mxu0 0
      %658 = vmatpush1.bf16.msra.mxu0 0
      %659 = vmatprep.subr.bf16.mxu0 0
      %660 = vmatpush1.bf16.msra.mxu0 0
      %661 = vmatprep.subr.bf16.mxu0 0
      %662 = vmatpush1.bf16.msra.mxu0 0
      %663 = vmatprep.subr.bf16.mxu0 0
      %664 = vmatpush1.bf16.msra.mxu0 0
      %665 = vmatprep.subr.bf16.mxu0 0
      %666 = vmatpush1.bf16.msra.mxu0 0
      %667 = vmatprep.mubr.bf16.mxu0 0
      %668 = vmatmul.mubr.bf16.gmra.mrb[0].mxu0 %v573
      %v669 = vpop.f32.mrb[0].mxu0
      %v670 = vadd.f32 %v585, %v669
      %v671 = vpop.f32.mrb[0].mxu0
      %v672 = vpop.f32.mrb[0].mxu0
      %v673 = vadd.f32 %v585, %v672
      %v674 = vpop.f32.mrb[0].mxu0
      %675 = vmatprep.mubr.bf16.mxu0 0
      %676 = vmatmul.mubr.bf16.gmra.mrb[0].mxu0 %v574
      %v677 = vpop.f32.mrb[0].mxu0
      %v678 = vadd.f32 %v585, %v677
      %v679 = vpop.f32.mrb[0].mxu0
      %v680 = vpop.f32.mrb[0].mxu0
      %v681 = vadd.f32 %v585, %v680
      %v682 = vpop.f32.mrb[0].mxu0
      %683 = vmatprep.mubr.bf16.mxu0 0
      %684 = vmatmul.mubr.bf16.gmra.mrb[0].mxu0 %v575
      %v685 = vpop.f32.mrb[0].mxu0
      %v686 = vadd.f32 %v585, %v685
      %v687 = vpop.f32.mrb[0].mxu0
      %v688 = vpop.f32.mrb[0].mxu0
      %v689 = vadd.f32 %v585, %v688
      %v690 = vpop.f32.mrb[0].mxu0
      %691 = vmatprep.mubr.bf16.mxu0 0
      %692 = vmatmul.mubr.bf16.gmra.mrb[0].mxu0 %v576
      %v693 = vpop.f32.mrb[0].mxu0
      %v694 = vadd.f32 %v585, %v693
      %v695 = vpop.f32.mrb[0].mxu0
      %v696 = vpop.f32.mrb[0].mxu0
      %v697 = vadd.f32 %v585, %v696
      %v698 = vpop.f32.mrb[0].mxu0
      %699 = vmatprep.mubr.bf16.mxu0 0
      %700 = vmatmul.mubr.bf16.gmra.mrb[0].mxu0 %v577
      %v701 = vpop.f32.mrb[0].mxu0
      %v702 = vadd.f32 %v585, %v701
      %v703 = vpop.f32.mrb[0].mxu0
      %v704 = vpop.f32.mrb[0].mxu0
      %v705 = vadd.f32 %v585, %v704
      %v706 = vpop.f32.mrb[0].mxu0
      %707 = vmatprep.mubr.bf16.mxu0 0
      %708 = vmatmul.mubr.bf16.gmra.mrb[0].mxu0 %v578
      %v709 = vpop.f32.mrb[0].mxu0
      %v710 = vadd.f32 %v585, %v709
      %v711 = vpop.f32.mrb[0].mxu0
      %v712 = vpop.f32.mrb[0].mxu0
      %v713 = vadd.f32 %v585, %v712
      %v714 = vpop.f32.mrb[0].mxu0
      %715 = vmatprep.mubr.bf16.mxu0 0
      %716 = vmatmul.mubr.bf16.gmra.mrb[0].mxu0 %v579
      %v717 = vpop.f32.mrb[0].mxu0
      %v718 = vadd.f32 %v585, %v717
      %v719 = vpop.f32.mrb[0].mxu0
      %v720 = vpop.f32.mrb[0].mxu0
      %v721 = vadd.f32 %v585, %v720
      %v722 = vpop.f32.mrb[0].mxu0
      %723 = vmatprep.mubr.bf16.mxu0 0
      %724 = vmatmul.mubr.bf16.gmra.mrb[0].mxu0 %v580
      %v725 = vpop.f32.mrb[0].mxu0
      %v726 = vadd.f32 %v585, %v725
      %v727 = vpop.f32.mrb[0].mxu0
      %v728 = vpop.f32.mrb[0].mxu0
      %v729 = vadd.f32 %v585, %v728
      %v730 = vpop.f32.mrb[0].mxu0
      %731 = vdwg.mxu0
      %v732 = vmax.f32 %v670, 0.0
      %v733 = vmax.f32 %v673, 0.0
      %v734 = vmax.f32 %v678, 0.0
      %v735 = vmax.f32 %v681, 0.0
      %v736 = vmax.f32 %v686, 0.0
      %v737 = vmax.f32 %v689, 0.0
      %v738 = vmax.f32 %v694, 0.0
      %v739 = vmax.f32 %v697, 0.0
      %v740 = vmax.f32 %v702, 0.0
      %v741 = vmax.f32 %v705, 0.0
      %v742 = vmax.f32 %v710, 0.0
      %v743 = vmax.f32 %v713, 0.0
      %v744 = vmax.f32 %v718, 0.0
      %v745 = vmax.f32 %v721, 0.0
      %v746 = vmax.f32 %v726, 0.0
      %v747 = vmax.f32 %v729, 0.0
      %v748 = vld [vmem:[%s5] sm:$0xf]
      %v749 = vld [vmem:[%s5 + $0x4] sm:$0xf]
      %v750 = vld [vmem:[%s5 + $0x8] sm:$0xf]
      %v751 = vld [vmem:[%s5 + $0xc] sm:$0xf]
      %v752 = vld [vmem:[%s5 + $0x10] sm:$0xf]
      %v753 = vld [vmem:[%s5 + $0x14] sm:$0xf]
      %v754 = vld [vmem:[%s5 + $0x18] sm:$0xf]
      %v755 = vld [vmem:[%s5 + $0x1c] sm:$0xf]
      %v756 = vld [vmem:[%s5 + $0x20] sm:$0xf]
      %v757 = vld [vmem:[%s5 + $0x24] sm:$0xf]
      %v758 = vld [vmem:[%s5 + $0x28] sm:$0xf]
      %v759 = vld [vmem:[%s5 + $0x2c] sm:$0xf]
      %v760 = vld [vmem:[%s5 + $0x30] sm:$0xf]
      %v761 = vld [vmem:[%s5 + $0x34] sm:$0xf]
      %v762 = vld [vmem:[%s5 + $0x38] sm:$0xf]
      %v763 = vld [vmem:[%s5 + $0x3c] sm:$0xf]
      %v764 = vld [vmem:[%s6] sm:$0x1]
      %v765 = vpack.c.bf16 %v733, %v732
      %v766 = vpack.c.bf16 %v735, %v734
      %v767 = vpack.c.bf16 %v737, %v736
      %v768 = vpack.c.bf16 %v739, %v738
      %v769 = vpack.c.bf16 %v741, %v740
      %v770 = vpack.c.bf16 %v743, %v742
      %v771 = vpack.c.bf16 %v745, %v744
      %v772 = vpack.c.bf16 %v747, %v746
      %v774 = vlaneseq
      %v775 = vshrl.u32 %v774, 7
      %v776 = vsub.s32 0, %v775
      %v777 = vrot.slane %v764, %v776
      %v795 = vunpack.c.l.b16 %v748
      %v796 = vunpack.c.l.b16 %v749
      %v797 = vunpack.c.l.b16 %v750
      %v798 = vunpack.c.l.b16 %v751
      %v799 = vunpack.c.l.b16 %v752
      %v800 = vunpack.c.l.b16 %v753
      %v801 = vunpack.c.l.b16 %v754
      %v802 = vunpack.c.l.b16 %v755
      %v803 = vunpack.c.l.b16 %v756
      %v804 = vunpack.c.l.b16 %v757
      %v805 = vunpack.c.l.b16 %v758
      %v806 = vunpack.c.l.b16 %v759
      %v807 = vunpack.c.l.b16 %v760
      %v808 = vunpack.c.l.b16 %v761
      %v809 = vunpack.c.l.b16 %v762
      %v810 = vunpack.c.l.b16 %v763
      %v811 = vpack.c.b16 %v796, %v795
      %v812 = vpack.c.b16 %v798, %v797
      %v813 = vpack.c.b16 %v800, %v799
      %v814 = vpack.c.b16 %v802, %v801
      %v815 = vpack.c.b16 %v804, %v803
      %v816 = vpack.c.b16 %v806, %v805
      %v817 = vpack.c.b16 %v808, %v807
      %v818 = vpack.c.b16 %v810, %v809
      %827 = vmatprep.subr.bf16.mxu0 0
      %828 = vmatpush1.bf16.msra.mxu0 %v811
      %829 = vmatprep.subr.bf16.mxu0 0
      %830 = vmatpush1.bf16.msra.mxu0 %v812
      %831 = vmatprep.subr.bf16.mxu0 0
      %832 = vmatpush1.bf16.msra.mxu0 %v813
      %833 = vmatprep.subr.bf16.mxu0 0
      %834 = vmatpush1.bf16.msra.mxu0 %v814
      %835 = vmatprep.subr.bf16.mxu0 0
      %836 = vmatpush1.bf16.msra.mxu0 %v815
      %837 = vmatprep.subr.bf16.mxu0 0
      %838 = vmatpush1.bf16.msra.mxu0 %v816
      %839 = vmatprep.subr.bf16.mxu0 0
      %840 = vmatpush1.bf16.msra.mxu0 %v817
      %841 = vmatprep.subr.bf16.mxu0 0
      %842 = vmatpush1.bf16.msra.mxu0 %v818
      %843 = vmatprep.subr.bf16.mxu0 0
      %844 = vmatpush1.bf16.msra.mxu0 0
      %845 = vmatprep.subr.bf16.mxu0 0
      %846 = vmatpush1.bf16.msra.mxu0 0
      %847 = vmatprep.subr.bf16.mxu0 0
      %848 = vmatpush1.bf16.msra.mxu0 0
      %849 = vmatprep.subr.bf16.mxu0 0
      %850 = vmatpush1.bf16.msra.mxu0 0
      %851 = vmatprep.subr.bf16.mxu0 0
      %852 = vmatpush1.bf16.msra.mxu0 0
      %853 = vmatprep.subr.bf16.mxu0 0
      %854 = vmatpush1.bf16.msra.mxu0 0
      %855 = vmatprep.subr.bf16.mxu0 0
      %856 = vmatpush1.bf16.msra.mxu0 0
      %857 = vmatprep.subr.bf16.mxu0 0
      %858 = vmatpush1.bf16.msra.mxu0 0
      %859 = vmatprep.mubr.bf16.mxu0 0
      %860 = vmatmul.mubr.bf16.gmra.mrb[0].mxu0 %v765
      %v861 = vpop.f32.mrb[0].mxu0
      %v862 = vadd.f32 %v777, %v861
      %v863 = vpop.f32.mrb[0].mxu0
      %v864 = vpop.f32.mrb[0].mxu0
      %v865 = vadd.f32 %v777, %v864
      %v866 = vpop.f32.mrb[0].mxu0
      %867 = vmatprep.mubr.bf16.mxu0 0
      %868 = vmatmul.mubr.bf16.gmra.mrb[0].mxu0 %v766
      %v869 = vpop.f32.mrb[0].mxu0
      %v870 = vadd.f32 %v777, %v869
      %v871 = vpop.f32.mrb[0].mxu0
      %v872 = vpop.f32.mrb[0].mxu0
      %v873 = vadd.f32 %v777, %v872
      %v874 = vpop.f32.mrb[0].mxu0
      %875 = vmatprep.mubr.bf16.mxu0 0
      %876 = vmatmul.mubr.bf16.gmra.mrb[0].mxu0 %v767
      %v877 = vpop.f32.mrb[0].mxu0
      %v878 = vadd.f32 %v777, %v877
      %v879 = vpop.f32.mrb[0].mxu0
      %v880 = vpop.f32.mrb[0].mxu0
      %v881 = vadd.f32 %v777, %v880
      %v882 = vpop.f32.mrb[0].mxu0
      %883 = vmatprep.mubr.bf16.mxu0 0
      %884 = vmatmul.mubr.bf16.gmra.mrb[0].mxu0 %v768
      %v885 = vpop.f32.mrb[0].mxu0
      %v886 = vadd.f32 %v777, %v885
      %v887 = vpop.f32.mrb[0].mxu0
      %v888 = vpop.f32.mrb[0].mxu0
      %v889 = vadd.f32 %v777, %v888
      %v890 = vpop.f32.mrb[0].mxu0
      %891 = vmatprep.mubr.bf16.mxu0 0
      %892 = vmatmul.mubr.bf16.gmra.mrb[0].mxu0 %v769
      %v893 = vpop.f32.mrb[0].mxu0
      %v894 = vadd.f32 %v777, %v893
      %v895 = vpop.f32.mrb[0].mxu0
      %v896 = vpop.f32.mrb[0].mxu0
      %v897 = vadd.f32 %v777, %v896
      %v898 = vpop.f32.mrb[0].mxu0
      %899 = vmatprep.mubr.bf16.mxu0 0
      %900 = vmatmul.mubr.bf16.gmra.mrb[0].mxu0 %v770
      %v901 = vpop.f32.mrb[0].mxu0
      %v902 = vadd.f32 %v777, %v901
      %v903 = vpop.f32.mrb[0].mxu0
      %v904 = vpop.f32.mrb[0].mxu0
      %v905 = vadd.f32 %v777, %v904
      %v906 = vpop.f32.mrb[0].mxu0
      %907 = vmatprep.mubr.bf16.mxu0 0
      %908 = vmatmul.mubr.bf16.gmra.mrb[0].mxu0 %v771
      %v909 = vpop.f32.mrb[0].mxu0
      %v910 = vadd.f32 %v777, %v909
      %v911 = vpop.f32.mrb[0].mxu0
      %v912 = vpop.f32.mrb[0].mxu0
      %v913 = vadd.f32 %v777, %v912
      %v914 = vpop.f32.mrb[0].mxu0
      %915 = vmatprep.mubr.bf16.mxu0 0
      %916 = vmatmul.mubr.bf16.gmra.mrb[0].mxu0 %v772
      %v917 = vpop.f32.mrb[0].mxu0
      %v918 = vadd.f32 %v777, %v917
      %v919 = vpop.f32.mrb[0].mxu0
      %v920 = vpop.f32.mrb[0].mxu0
      %v921 = vadd.f32 %v777, %v920
      %v922 = vpop.f32.mrb[0].mxu0
      %923 = vdwg.mxu0
      %v924 = vmax.f32 %v862, 0.0
      %v925 = vmax.f32 %v865, 0.0
      %v926 = vmax.f32 %v870, 0.0
      %v927 = vmax.f32 %v873, 0.0
      %v928 = vmax.f32 %v878, 0.0
      %v929 = vmax.f32 %v881, 0.0
      %v930 = vmax.f32 %v886, 0.0
      %v931 = vmax.f32 %v889, 0.0
      %v932 = vmax.f32 %v894, 0.0
      %v933 = vmax.f32 %v897, 0.0
      %v934 = vmax.f32 %v902, 0.0
      %v935 = vmax.f32 %v905, 0.0
      %v936 = vmax.f32 %v910, 0.0
      %v937 = vmax.f32 %v913, 0.0
      %v938 = vmax.f32 %v918, 0.0
      %v939 = vmax.f32 %v921, 0.0
      %v940 = vld [vmem:[%s7] sm:$0x1]
      %v941 = vld [vmem:[#allocation2] sm:$0x1]
      %v943 = vlaneseq
      %v944 = vshrl.u32 %v943, 7
      %v945 = vsub.s32 0, %v944
      %v946 = vrot.slane %v940, %v945
      %v948 = vmul.f32 %v924, %v946
      %v949 = vmul.f32 %v925, %v946
      %v950 = vmul.f32 %v926, %v946
      %v951 = vmul.f32 %v927, %v946
      %v952 = vmul.f32 %v928, %v946
      %v953 = vmul.f32 %v929, %v946
      %v954 = vmul.f32 %v930, %v946
      %v955 = vmul.f32 %v931, %v946
      %v956 = vmul.f32 %v932, %v946
      %v957 = vmul.f32 %v933, %v946
      %v958 = vmul.f32 %v934, %v946
      %v959 = vmul.f32 %v935, %v946
      %v960 = vmul.f32 %v936, %v946
      %v961 = vmul.f32 %v937, %v946
      %v962 = vmul.f32 %v938, %v946
      %v963 = vmul.f32 %v939, %v946
      %964 = vadd.xlane.f32.xlu0 %v948
      %v965 = vpop.xlane.xlu0 %964
      %966 = vadd.xlane.f32.xlu0 %v949
      %v967 = vpop.xlane.xlu0 %966
      %968 = vadd.xlane.f32.xlu0 %v950
      %v969 = vpop.xlane.xlu0 %968
      %970 = vadd.xlane.f32.xlu0 %v951
      %v971 = vpop.xlane.xlu0 %970
      %972 = vadd.xlane.f32.xlu0 %v952
      %v973 = vpop.xlane.xlu0 %972
      %974 = vadd.xlane.f32.xlu0 %v953
      %v975 = vpop.xlane.xlu0 %974
      %976 = vadd.xlane.f32.xlu0 %v954
      %v977 = vpop.xlane.xlu0 %976
      %978 = vadd.xlane.f32.xlu0 %v955
      %v979 = vpop.xlane.xlu0 %978
      %980 = vadd.xlane.f32.xlu0 %v956
      %v981 = vpop.xlane.xlu0 %980
      %982 = vadd.xlane.f32.xlu0 %v957
      %v983 = vpop.xlane.xlu0 %982
      %984 = vadd.xlane.f32.xlu0 %v958
      %v985 = vpop.xlane.xlu0 %984
      %986 = vadd.xlane.f32.xlu0 %v959
      %v987 = vpop.xlane.xlu0 %986
      %988 = vadd.xlane.f32.xlu0 %v960
      %v989 = vpop.xlane.xlu0 %988
      %990 = vadd.xlane.f32.xlu0 %v961
      %v991 = vpop.xlane.xlu0 %990
      %992 = vadd.xlane.f32.xlu0 %v962
      %v993 = vpop.xlane.xlu0 %992
      %994 = vadd.xlane.f32.xlu0 %v963
      %v995 = vpop.xlane.xlu0 %994
      %v997 = vlaneseq
      %v998 = vshrl.u32 %v997, 7
      %v999 = vsub.s32 0, %v998
      %v1000 = vrot.slane %v941, %v999
      %v1002 = vadd.f32 %v965, %v1000
      %v1003 = vadd.f32 %v967, %v1000
      %v1004 = vadd.f32 %v969, %v1000
      %v1005 = vadd.f32 %v971, %v1000
      %v1006 = vadd.f32 %v973, %v1000
      %v1007 = vadd.f32 %v975, %v1000
      %v1008 = vadd.f32 %v977, %v1000
      %v1009 = vadd.f32 %v979, %v1000
      %v1010 = vadd.f32 %v981, %v1000
      %v1011 = vadd.f32 %v983, %v1000
      %v1012 = vadd.f32 %v985, %v1000
      %v1013 = vadd.f32 %v987, %v1000
      %v1014 = vadd.f32 %v989, %v1000
      %v1015 = vadd.f32 %v991, %v1000
      %v1016 = vadd.f32 %v993, %v1000
      %v1017 = vadd.f32 %v995, %v1000
      %vm1018 = vcmask 7168
      %1019 = vst.msk [vmem:[%s336] sm:$0xff] %vm1018, %v1002
      %1020 = vst.msk [vmem:[%s336 + $0x8] sm:$0xff] %vm1018, %v1003
      %1021 = vst.msk [vmem:[%s336 + $0x10] sm:$0xff] %vm1018, %v1004
      %1022 = vst.msk [vmem:[%s336 + $0x18] sm:$0xff] %vm1018, %v1005
      %1023 = vst.msk [vmem:[%s336 + $0x20] sm:$0xff] %vm1018, %v1006
      %1024 = vst.msk [vmem:[%s336 + $0x28] sm:$0xff] %vm1018, %v1007
      %1025 = vst.msk [vmem:[%s336 + $0x30] sm:$0xff] %vm1018, %v1008
      %1026 = vst.msk [vmem:[%s336 + $0x38] sm:$0xff] %vm1018, %v1009
      %1027 = vst.msk [vmem:[%s336 + $0x40] sm:$0xff] %vm1018, %v1010
      %1028 = vst.msk [vmem:[%s336 + $0x48] sm:$0xff] %vm1018, %v1011
      %1029 = vst.msk [vmem:[%s336 + $0x50] sm:$0xff] %vm1018, %v1012
      %1030 = vst.msk [vmem:[%s336 + $0x58] sm:$0xff] %vm1018, %v1013
      %1031 = vst.msk [vmem:[%s336 + $0x60] sm:$0xff] %vm1018, %v1014
      %1032 = vst.msk [vmem:[%s336 + $0x68] sm:$0xff] %vm1018, %v1015
      %1033 = vst.msk [vmem:[%s336 + $0x70] sm:$0xff] %vm1018, %v1016
      %1034 = vst.msk [vmem:[%s336 + $0x78] sm:$0xff] %vm1018, %v1017
      %s1035 = smul.u32 16, %s22
      %p1036 = scmp.lt.s32.totalorder %s1035, 31
      %s1037 = scalar_select %p1036, %s1035, 31
      %s1038 = smul.addr %s1037, 8
      %s1039 = scalar_lea.vmem %s9, %s1038
      // Predicated region
      $region57: #{_forward_impl.1} parent=55 // pred_check
        %p1040 = pneg %p234
      $region58: #{_forward_impl.1} parent=55 // pred_check_branch
        %1042 = sbr.rel (%p1040) target = $region60
      $region59: #{_forward_impl.1} parent=55 // pred_region
        %s1043 = smul.u32 16, %s22
      $region60: #{_forward_impl.1} parent=55 // pred_fallthru
        _
    $region56: #{_forward_impl.1} parent=5 // pred_fallthru
      _
    %p1044 = scmp.le.s32.totalorder 2, %s17
    // Predicated region
    $region61: #{_forward_impl.1} parent=5 // pred_check
      %p1045 = pneg %p1044
    $region62: #{_forward_impl.1} parent=5 // pred_check_branch
      %1047 = sbr.rel (%p1045) target = $region64
    $region63: #{_forward_impl.1} parent=5 // pred_region
      %s1048 = ssub.s32 %s17, 2
      // Predicated region
      $region65: #{_forward_impl.1} parent=63 // pred_check
        %p1049 = pneg %p240
      $region66: #{_forward_impl.1} parent=63 // pred_check_branch
        %1051 = sbr.rel (%p1049) target = $region68
      $region67: #{_forward_impl.1} parent=63 // pred_region
        %s1052 = smul.u32 16, %s23
        %p1053 = scmp.lt.s32.totalorder %s1052, 31
        %s1054 = scalar_select %p1053, %s1052, 31
        %s1055 = smul.addr %s1054, 8
        %s1056 = scalar_lea.vmem %s9, %s1055
      $region68: #{_forward_impl.1} parent=63 // pred_fallthru
        _
    $region64: #{_forward_impl.1} parent=5 // pred_fallthru
      _
  $region6: #{_forward_impl.1} parent=0 // loop_footer
    %s21 = sadd.s32 1, %s17
  $region7: #{_forward_impl.1} parent=0 // loop_footer_branch
    %16 = sbr.rel target = $region3
  $region8: #{_forward_impl.1} parent=0 // loop_exit
    _

</llo_original>
